<compile_context>
chip_gen: v6e
topology: v6e:2x2x1
jax: 0.10.0
libtpu: 0.0.40
codegen_flags: <defaults>
</compile_context>

<pallas_src>
import math
from functools import partial

import jax
import jax.numpy as jnp
from jax import lax
from jax.experimental import pallas as pl
from jax.experimental.pallas import tpu as pltpu


_MASK_VALUE = -1e30  # large negative for masked logits (exp underflows to 0, no NaN path)


def _fit_tile(dim, preferred, align):
    """Largest tile <= preferred that divides `dim` and is a multiple of `align`.
    Falls back to the full dimension (always a legal block size)."""
    if dim <= preferred:
        return dim
    t = (preferred // align) * align
    while t >= align:
        if dim % t == 0:
            return t
        t -= align
    return dim


# ----------------------------- tiled linear (x @ W^T) -----------------------------

def _linear_kernel(x_ref, w_ref, o_ref, acc_ref):
    @pl.when(pl.program_id(2) == 0)
    def _init():
        acc_ref[...] = jnp.zeros_like(acc_ref)

    # W is in PyTorch (N, K) layout; contract K with K (no transpose copies in HBM).
    acc_ref[...] += lax.dot_general(
        x_ref[...], w_ref[...], (((1,), (1,)), ((), ())),
        preferred_element_type=jnp.float32)

    @pl.when(pl.program_id(2) == pl.num_programs(2) - 1)
    def _done():
        o_ref[...] = acc_ref[...].astype(o_ref.dtype)


def linear(x, w, *, tm=256, tn=256, tk=512):
    """x: (M, K); w: (N, K) (nn.Linear weight layout, bias-free)."""
    M, K = x.shape
    N, K2 = w.shape
    assert K == K2
    tm = _fit_tile(M, tm, 8)
    tn = _fit_tile(N, tn, 128)
    tk = _fit_tile(K, tk, 128)
    grid = (M // tm, N // tn, K // tk)
    return pl.pallas_call(
        _linear_kernel,
        out_shape=jax.ShapeDtypeStruct((M, N), x.dtype),
        grid=grid,
        in_specs=[
            pl.BlockSpec((tm, tk), lambda i, j, k: (i, k)),
            pl.BlockSpec((tn, tk), lambda i, j, k: (j, k)),
        ],
        out_specs=pl.BlockSpec((tm, tn), lambda i, j, k: (i, j)),
        scratch_shapes=[pltpu.VMEM((tm, tn), jnp.float32)],
        compiler_params=pltpu.CompilerParams(
            dimension_semantics=("parallel", "parallel", "arbitrary")),
    )(x, w)


# -------------------- projection straight into (B, heads, S, D) layout --------------------

def _head_proj_kernel(x_ref, w_ref, o_ref, acc_ref):
    @pl.when(pl.program_id(3) == 0)
    def _init():
        acc_ref[...] = jnp.zeros_like(acc_ref)

    tm, tk = x_ref.shape[1], x_ref.shape[2]
    D = w_ref.shape[1]
    x = x_ref[...].reshape(tm, tk)
    w = w_ref[...].reshape(D, tk)
    acc_ref[...] += lax.dot_general(
        x, w, (((1,), (1,)), ((), ())), preferred_element_type=jnp.float32)

    @pl.when(pl.program_id(3) == pl.num_programs(3) - 1)
    def _done():
        o_ref[...] = acc_ref[...].reshape(1, 1, tm, D).astype(o_ref.dtype)


def linear_to_heads(x, w, num_heads, head_dim, *, tm=256, tk=512):
    """x: (B, S, H); w: (num_heads*head_dim, H). Returns (B, num_heads, S, head_dim)
    without any HBM transpose (the out_spec index_map does the layout)."""
    B, S, H = x.shape
    w4 = w.reshape(num_heads, head_dim, H)      # free reshape (metadata only)
    tm = _fit_tile(S, tm, 8)
    tk = _fit_tile(H, tk, 128)
    grid = (B, num_heads, S // tm, H // tk)
    return pl.pallas_call(
        _head_proj_kernel,
        out_shape=jax.ShapeDtypeStruct((B, num_heads, S, head_dim), x.dtype),
        grid=grid,
        in_specs=[
            pl.BlockSpec((1, tm, tk), lambda b, h, i, k: (b, i, k)),
            pl.BlockSpec((1, head_dim, tk), lambda b, h, i, k: (h, 0, k)),
        ],
        out_specs=pl.BlockSpec((1, 1, tm, head_dim), lambda b, h, i, k: (b, h, i, 0)),
        scratch_shapes=[pltpu.VMEM((tm, head_dim), jnp.float32)],
        compiler_params=pltpu.CompilerParams(
            dimension_semantics=("parallel", "parallel", "parallel", "arbitrary")),
    )(x, w4)


# --------------------------- fused SwiGLU (silu(x@Wg^T) * (x@Wu^T)) ---------------------------

def _swiglu_kernel(x_ref, wg_ref, wu_ref, o_ref, accg_ref, accu_ref):
    @pl.when(pl.program_id(2) == 0)
    def _init():
        accg_ref[...] = jnp.zeros_like(accg_ref)
        accu_ref[...] = jnp.zeros_like(accu_ref)

    x = x_ref[...]
    dims = (((1,), (1,)), ((), ()))
    accg_ref[...] += lax.dot_general(x, wg_ref[...], dims, preferred_element_type=jnp.float32)
    accu_ref[...] += lax.dot_general(x, wu_ref[...], dims, preferred_element_type=jnp.float32)

    @pl.when(pl.program_id(2) == pl.num_programs(2) - 1)
    def _done():
        g = accg_ref[...]
        o_ref[...] = (g * jax.nn.sigmoid(g) * accu_ref[...]).astype(o_ref.dtype)


def swiglu(x, w_gate, w_up, *, tm=256, tn=256, tk=512):
    M, K = x.shape
    N = w_gate.shape[0]
    tm = _fit_tile(M, tm, 8)
    tn = _fit_tile(N, tn, 128)
    tk = _fit_tile(K, tk, 128)
    grid = (M // tm, N // tn, K // tk)
    return pl.pallas_call(
        _swiglu_kernel,
        out_shape=jax.ShapeDtypeStruct((M, N), x.dtype),
        grid=grid,
        in_specs=[
            pl.BlockSpec((tm, tk), lambda i, j, k: (i, k)),
            pl.BlockSpec((tn, tk), lambda i, j, k: (j, k)),
            pl.BlockSpec((tn, tk), lambda i, j, k: (j, k)),
        ],
        out_specs=pl.BlockSpec((tm, tn), lambda i, j, k: (i, j)),
        scratch_shapes=[pltpu.VMEM((tm, tn), jnp.float32),
                        pltpu.VMEM((tm, tn), jnp.float32)],
        compiler_params=pltpu.CompilerParams(
            dimension_semantics=("parallel", "parallel", "arbitrary")),
    )(x, w_gate, w_up)


# --------------------------------------- RMSNorm ---------------------------------------

def _rmsnorm_kernel(x_ref, w_ref, o_ref, *, eps):
    x = x_ref[...].astype(jnp.float32)
    var = jnp.mean(x * x, axis=-1, keepdims=True)
    y = x * lax.rsqrt(var + eps)
    o_ref[...] = (w_ref[...].astype(jnp.float32) * y).astype(o_ref.dtype)


def rmsnorm(x2d, w, eps, *, tm=256):
    M, H = x2d.shape
    tm = _fit_tile(M, tm, 8)
    return pl.pallas_call(
        partial(_rmsnorm_kernel, eps=eps),
        out_shape=jax.ShapeDtypeStruct((M, H), x2d.dtype),
        grid=(M // tm,),
        in_specs=[
            pl.BlockSpec((tm, H), lambda i: (i, 0)),
            pl.BlockSpec((1, H), lambda i: (0, 0)),
        ],
        out_specs=pl.BlockSpec((tm, H), lambda i: (i, 0)),
        compiler_params=pltpu.CompilerParams(dimension_semantics=("parallel",)),
    )(x2d, w.reshape(1, H))


# --------------------------- flash-style GQA attention (fused RoPE) ---------------------------

def _rotate_half(x):
    h = x.shape[-1] // 2
    return jnp.concatenate([-x[..., h:], x[..., :h]], axis=-1)


def _flash_gqa_kernel(q_ref, k_ref, v_ref, cq_ref, sq_ref, ck_ref, sk_ref,
                      o_ref, m_scr, l_scr, acc_scr, *, scale):
    qi = pl.program_id(2)
    ki = pl.program_id(3)
    _, tq, _, groups, D = q_ref.shape
    tkv = k_ref.shape[2]

    @pl.when(ki == 0)
    def _init():
        m_scr[...] = jnp.full_like(m_scr, _MASK_VALUE)
        l_scr[...] = jnp.zeros_like(l_scr)
        acc_scr[...] = jnp.zeros_like(acc_scr)

    # Skip KV tiles that lie entirely above the causal diagonal (DMA still pipelined).
    @pl.when(ki * tkv <= qi * tq + (tq - 1))
    def _compute():
        # ---- fused RoPE: Q/K rotated on-the-fly (never written back to HBM rotated) ----
        q = q_ref[...].reshape(tq, groups, D)
        cq = cq_ref[...].reshape(tq, 1, D).astype(q.dtype)
        sq = sq_ref[...].reshape(tq, 1, D).astype(q.dtype)
        q = q * cq + _rotate_half(q) * sq

        k = k_ref[...].reshape(tkv, D)
        ck = ck_ref[...].reshape(tkv, D).astype(k.dtype)
        sk = sk_ref[...].reshape(tkv, D).astype(k.dtype)
        k = k * ck + _rotate_half(k) * sk

        # Group-batched GQA: one (groups*tq, D) x (D, tkv) matmul per KV tile.
        qf = q.reshape(tq * groups, D)
        s = lax.dot_general(qf, k, (((1,), (1,)), ((), ())),
                            preferred_element_type=jnp.float32) * scale

        # Causal mask generated in-kernel (no (B,1,S,S) additive mask tensor in HBM).
        r_q = lax.broadcasted_iota(jnp.int32, (tq, groups, tkv), 0).reshape(tq * groups, tkv)
        k_c = lax.broadcasted_iota(jnp.int32, (tq * groups, tkv), 1)
        q_pos = qi * tq + r_q
        k_pos = ki * tkv + k_c
        s = jnp.where(q_pos >= k_pos, s, _MASK_VALUE)

        # Online softmax (f32 running stats in scratch).
        m_prev = m_scr[...]
        m_new = jnp.maximum(m_prev, jnp.max(s, axis=-1, keepdims=True))
        alpha = jnp.exp(m_prev - m_new)
        p = jnp.exp(s - m_new)
        l_scr[...] = alpha * l_scr[...] + jnp.sum(p, axis=-1, keepdims=True)
        acc_scr[...] = alpha * acc_scr[...] + lax.dot_general(
            p.astype(v_ref.dtype), v_ref[...].reshape(tkv, D),
            (((1,), (0,)), ((), ())), preferred_element_type=jnp.float32)
        m_scr[...] = m_new

    @pl.when(ki == pl.num_programs(3) - 1)
    def _finalize():
        inv_l = pl.reciprocal(l_scr[...], approx=True)   # EUP slot: effectively free
        out = acc_scr[...] * inv_l
        o_ref[...] = out.reshape(1, tq, 1, groups, D).astype(o_ref.dtype)
        # TODO(synk): attention dropout omitted (p=config.attention_dropout / eval mode).


def flash_gqa_attention(q, k, v, cos_g, sin_g, *, tq=128, tkv=128):
    """q:   (B, S, n_kv, groups, D)   token-major (free reshape of the q_proj output)
       k,v: (B, n_kv, S, D)           head-major  (written directly by linear_to_heads)
       cos_g/sin_g: (B, S, D) f32 RoPE tables gathered at position_ids.
       Returns (B, S, n_kv, groups, D) (free reshape to (B*S, n_heads*D) for o_proj)."""
    B, S, nkv, groups, D = q.shape
    scale = 1.0 / math.sqrt(D)
    tq = _fit_tile(S, tq, 8)
    tkv = _fit_tile(S, tkv, 8)
    grid = (B, nkv, S // tq, S // tkv)
    kernel = partial(_flash_gqa_kernel, scale=scale)
    return pl.pallas_call(
        kernel,
        out_shape=jax.ShapeDtypeStruct((B, S, nkv, groups, D), q.dtype),
        grid=grid,
        in_specs=[
            pl.BlockSpec((1, tq, 1, groups, D), lambda b, h, i, j: (b, i, h, 0, 0)),
            pl.BlockSpec((1, 1, tkv, D), lambda b, h, i, j: (b, h, j, 0)),
            pl.BlockSpec((1, 1, tkv, D), lambda b, h, i, j: (b, h, j, 0)),
            pl.BlockSpec((1, tq, D), lambda b, h, i, j: (b, i, 0)),
            pl.BlockSpec((1, tq, D), lambda b, h, i, j: (b, i, 0)),
            pl.BlockSpec((1, tkv, D), lambda b, h, i, j: (b, j, 0)),
            pl.BlockSpec((1, tkv, D), lambda b, h, i, j: (b, j, 0)),
        ],
        out_specs=pl.BlockSpec((1, tq, 1, groups, D), lambda b, h, i, j: (b, i, h, 0, 0)),
        scratch_shapes=[
            pltpu.VMEM((tq * groups, 1), jnp.float32),   # running max
            pltpu.VMEM((tq * groups, 1), jnp.float32),   # running denominator
            pltpu.VMEM((tq * groups, D), jnp.float32),   # output accumulator
        ],
        compiler_params=pltpu.CompilerParams(
            dimension_semantics=("parallel", "parallel", "parallel", "arbitrary")),
    )(q, k, v, cos_g, sin_g, cos_g, sin_g)


# ------------------------------------ RoPE tables (glue) ------------------------------------

def rope_tables(max_pos, dim, base):
    inv_freq = 1.0 / (base ** (jnp.arange(0, dim, 2, dtype=jnp.float32) / dim))
    t = jnp.arange(max_pos, dtype=jnp.float32)
    freqs = jnp.outer(t, inv_freq)
    emb = jnp.concatenate([freqs, freqs], axis=-1)
    return jnp.cos(emb), jnp.sin(emb)


# --------------------------------------- model forward ---------------------------------------

def attention_block(lp, h, cos_g, sin_g, cfg):
    B, S, H = h.shape
    nh, nkv, d = cfg["num_heads"], cfg["num_kv_heads"], cfg["head_dim"]
    groups = nh // nkv
    h2d = h.reshape(B * S, H)
    # Q stays token-major -> free reshape, no HBM transpose.
    q = linear(h2d, lp["wq"]).reshape(B, S, nkv, groups, d)
    # K/V are written head-major directly by the projection kernel.
    k = linear_to_heads(h, lp["wk"], nkv, d)
    v = linear_to_heads(h, lp["wv"], nkv, d)
    attn = flash_gqa_attention(q, k, v, cos_g, sin_g)          # (B, S, nkv, groups, d)
    out = linear(attn.reshape(B * S, nh * d), lp["wo"])        # free reshape, no transpose
    return out.reshape(B, S, H)


def decoder_layer(lp, x, cos_g, sin_g, cfg):
    B, S, H = x.shape
    eps = cfg["rms_eps"]
    h = rmsnorm(x.reshape(B * S, H), lp["input_ln"], eps).reshape(B, S, H)
    x = x + attention_block(lp, h, cos_g, sin_g, cfg)
    h2d = rmsnorm(x.reshape(B * S, H), lp["post_ln"], eps)
    mlp = linear(swiglu(h2d, lp["w_gate"], lp["w_up"]), lp["w_down"])
    return x + mlp.reshape(B, S, H)


def slm_forward(params, input_ids, cfg, position_ids=None):
    """SLMForCausalLM forward: embeddings -> decoder layers -> final RMSNorm -> tied lm_head."""
    B, S = input_ids.shape
    H = cfg["hidden_size"]
    if position_ids is None:
        position_ids = jnp.broadcast_to(jnp.arange(S, dtype=jnp.int32), (B, S))
    x = jnp.take(params["embed"], input_ids, axis=0)           # token-embedding gather (JAX glue)
    cos, sin = rope_tables(cfg["max_position_embeddings"], cfg["head_dim"], cfg["rope_base"])
    cos_g = cos[position_ids]                                   # (B, S, D) f32
    sin_g = sin[position_ids]
    for lp in params["layers"]:
        x = decoder_layer(lp, x, cos_g, sin_g, cfg)
    h2d = rmsnorm(x.reshape(B * S, H), params["final_ln"], cfg["rms_eps"])
    logits = linear(h2d, params["embed"])                       # tied embeddings lm head
    return logits.reshape(B, S, cfg["vocab_size"])
    # TODO(synk): labels -> cross-entropy loss path not implemented (labels=None case).


# ---------------------------------- pure-JAX reference ----------------------------------

def ref_rmsnorm(x, w, eps):
    x32 = x.astype(jnp.float32)
    var = jnp.mean(x32 * x32, axis=-1, keepdims=True)
    return (w.astype(jnp.float32) * (x32 * lax.rsqrt(var + eps))).astype(x.dtype)


def ref_attention(lp, h, mask, cos_g, sin_g, cfg):
    B, S, H = h.shape
    nh, nkv, d = cfg["num_heads"], cfg["num_kv_heads"], cfg["head_dim"]
    groups = nh // nkv
    h2d = h.reshape(B * S, H)
    q = (h2d @ lp["wq"].T).reshape(B, S, nh, d).transpose(0, 2, 1, 3)
    k = (h2d @ lp["wk"].T).reshape(B, S, nkv, d).transpose(0, 2, 1, 3)
    v = (h2d @ lp["wv"].T).reshape(B, S, nkv, d).transpose(0, 2, 1, 3)
    cos = cos_g[:, None]
    sin = sin_g[:, None]
    q = q * cos + _rotate_half(q) * sin
    k = k * cos + _rotate_half(k) * sin
    k = jnp.repeat(k, groups, axis=1)
    v = jnp.repeat(v, groups, axis=1)
    s = jnp.einsum("bhqd,bhkd->bhqk", q, k) / math.sqrt(d) + mask
    p = jax.nn.softmax(s.astype(jnp.float32), axis=-1).astype(q.dtype)
    o = jnp.einsum("bhqk,bhkd->bhqd", p, v)
    o = o.transpose(0, 2, 1, 3).reshape(B * S, nh * d)
    return (o @ lp["wo"].T).reshape(B, S, H)


def ref_forward(params, input_ids, cfg, position_ids=None):
    B, S = input_ids.shape
    H = cfg["hidden_size"]
    if position_ids is None:
        position_ids = jnp.broadcast_to(jnp.arange(S, dtype=jnp.int32), (B, S))
    x = jnp.take(params["embed"], input_ids, axis=0)
    cos, sin = rope_tables(cfg["max_position_embeddings"], cfg["head_dim"], cfg["rope_base"])
    cos_g = cos[position_ids]
    sin_g = sin[position_ids]
    neg = jnp.finfo(jnp.float32).min
    mask = jnp.triu(jnp.full((S, S), neg, dtype=jnp.float32), k=1)[None, None]
    for lp in params["layers"]:
        h = ref_rmsnorm(x, lp["input_ln"], cfg["rms_eps"])
        x = x + ref_attention(lp, h, mask, cos_g, sin_g, cfg)
        h = ref_rmsnorm(x, lp["post_ln"], cfg["rms_eps"])
        h2d = h.reshape(B * S, H)
        gate = h2d @ lp["w_gate"].T
        up = h2d @ lp["w_up"].T
        mlp = (jax.nn.silu(gate) * up) @ lp["w_down"].T
        x = x + mlp.reshape(B, S, H)
    x = ref_rmsnorm(x, params["final_ln"], cfg["rms_eps"])
    logits = x.reshape(B * S, H) @ params["embed"].T
    return logits.reshape(B, S, cfg["vocab_size"])


# --------------------------------------- params ---------------------------------------

def init_params(key, cfg):
    H, V = cfg["hidden_size"], cfg["vocab_size"]
    nh, nkv, d = cfg["num_heads"], cfg["num_kv_heads"], cfg["head_dim"]
    I = cfg["intermediate_size"]
    std = 0.02
    keys = iter(jax.random.split(key, 4 + 9 * cfg["num_layers"]))

    def w(shape):
        return std * jax.random.normal(next(keys), shape, jnp.float32)

    embed = w((V, H)).at[0].set(0.0)            # padding_idx = 0 zeroed, like torch
    params = dict(embed=embed, final_ln=jnp.ones((H,), jnp.float32), layers=[])
    for _ in range(cfg["num_layers"]):
        params["layers"].append(dict(
            input_ln=1.0 + 0.1 * jax.random.normal(next(keys), (H,), jnp.float32),
            post_ln=1.0 + 0.1 * jax.random.normal(next(keys), (H,), jnp.float32),
            wq=w((nh * d, H)),
            wk=w((nkv * d, H)),
            wv=w((nkv * d, H)),
            wo=w((H, nh * d)),
            w_gate=w((I, H)),
            w_up=w((I, H)),
            w_down=w((H, I)),
        ))
    return params


# ----------------------------------------- main -----------------------------------------

if __name__ == "__main__":
    cfg = dict(
        vocab_size=64, hidden_size=32, num_heads=4, num_kv_heads=2, head_dim=8,
        intermediate_size=64, num_layers=2, max_position_embeddings=32,
        rope_base=10000.0, rms_eps=1e-6,
    )
    B, S = 2, 8

    key = jax.random.PRNGKey(0)
    params = init_params(key, cfg)
    input_ids = jax.random.randint(jax.random.fold_in(key, 123), (B, S), 0,
                                   cfg["vocab_size"], dtype=jnp.int32)

    # f32 path (matches the PyTorch module numerics).
    out = jax.block_until_ready(slm_forward(params, input_ids, cfg))
    ref = ref_forward(params, input_ids, cfg)
    assert out.shape == (B, S, cfg["vocab_size"])
    max_err = float(jnp.max(jnp.abs(out - ref)))
    assert jnp.allclose(out, ref, atol=5e-3, rtol=5e-3), f"f32 max_err={max_err}"

    # bf16 operands with f32 accumulation (MXU-friendly path); loose sanity check vs f32 ref.
    params_bf16 = jax.tree_util.tree_map(
        lambda a: a.astype(jnp.bfloat16) if a.dtype == jnp.float32 else a, params)
    out_bf16 = jax.block_until_ready(slm_forward(params_bf16, input_ids, cfg))
    out_bf16_f32 = out_bf16.astype(jnp.float32)
    assert bool(jnp.all(jnp.isfinite(out_bf16_f32))), "bf16 run produced non-finite values"
    bf16_err = float(jnp.max(jnp.abs(out_bf16_f32 - ref)))
    assert bf16_err < 0.25, f"bf16 max_err={bf16_err}"

    print("KERNEL_OK")
</pallas_src>

<mosaic_0001>
module attributes {stable_mosaic.version = 11 : i64} {
  func.func @_rmsnorm_kernel(%arg0: i32, %arg1: memref<16x32xf32, #tpu.memory_space<vmem>>, %arg2: memref<1x32xf32, #tpu.memory_space<vmem>>, %arg3: memref<16x32xf32, #tpu.memory_space<vmem>>) attributes {dimension_semantics = [#tpu.dimension_semantics<parallel>], iteration_bounds = array<i64: 1>, scalar_prefetch = 0 : i64, scratch_operands = 0 : i64, tpu.core_type = #tpu.core_type<tc>, window_params = [{transform_indices = @transform_0, window_bounds = array<i64: 16, 32>}, {pipeline_mode = #tpu.pipeline_mode<synchronous>, transform_indices = @transform_1, window_bounds = array<i64: 1, 32>}, {transform_indices = @transform_2, window_bounds = array<i64: 16, 32>}]} {
    %c0 = arith.constant 0 : index
    %c0_0 = arith.constant 0 : index
    %0 = vector.load %arg1[%c0, %c0_0] : memref<16x32xf32, #tpu.memory_space<vmem>>, vector<16x32xf32>
    %1 = arith.mulf %0, %0 : vector<16x32xf32>
    %cst = arith.constant dense<0.000000e+00> : vector<16xf32>
    %2 = vector.multi_reduction <add>, %1, %cst [1] : vector<16x32xf32> to vector<16xf32>
    %3 = vector.shape_cast %2 : vector<16xf32> to vector<16x1xf32>
    %cst_1 = arith.constant 3.200000e+01 : f32
    %4 = vector.broadcast %cst_1 : f32 to vector<16x1xf32>
    %5 = arith.divf %3, %4 : vector<16x1xf32>
    %cst_2 = arith.constant 9.99999997E-7 : f32
    %6 = vector.broadcast %cst_2 : f32 to vector<16x1xf32>
    %7 = arith.addf %5, %6 : vector<16x1xf32>
    %8 = math.rsqrt %7 : vector<16x1xf32>
    %9 = vector.broadcast %8 : vector<16x1xf32> to vector<16x32xf32>
    %10 = arith.mulf %0, %9 : vector<16x32xf32>
    %c0_3 = arith.constant 0 : index
    %c0_4 = arith.constant 0 : index
    %11 = vector.load %arg2[%c0_3, %c0_4] : memref<1x32xf32, #tpu.memory_space<vmem>>, vector<1x32xf32>
    %12 = vector.broadcast %11 : vector<1x32xf32> to vector<16x32xf32>
    %13 = arith.mulf %12, %10 : vector<16x32xf32>
    %c0_5 = arith.constant 0 : index
    %c0_6 = arith.constant 0 : index
    %14 = vector.load %arg3[%c0_5, %c0_6] : memref<16x32xf32, #tpu.memory_space<vmem>>, vector<16x32xf32>
    tpu.vector_store %arg3[%c0_5, %c0_6], %13 {strides = array<i32>} : memref<16x32xf32, #tpu.memory_space<vmem>>, vector<16x32xf32>,
    return
  }
  func.func @transform_0(%arg0: i32) -> (i32, i32) {
    %c0_i32 = arith.constant 0 : i32
    %c0_i32_0 = arith.constant 0 : i32
    return %arg0, %c0_i32 : i32, i32
  }
  func.func @transform_1(%arg0: i32) -> (i32, i32) {
    %c0_i32 = arith.constant 0 : i32
    %c0_i32_0 = arith.constant 0 : i32
    %c0_i32_1 = arith.constant 0 : i32
    return %c0_i32, %c0_i32_0 : i32, i32
  }
  func.func @transform_2(%arg0: i32) -> (i32, i32) {
    %c0_i32 = arith.constant 0 : i32
    %c0_i32_0 = arith.constant 0 : i32
    return %arg0, %c0_i32 : i32, i32
  }
}

</mosaic_0001>

<llo_original>
// kernel: tpu_custom_call.1
$region0: #{tpu_custom_call.1}
  #allocation0 [shape = 'u32[]', space=smem, size = 0x4, offset = 0x4, fixed_abs, tag = 'smem constant byte address 0x4 - core index']
  #allocation1 [shape = 'u32[144,128]{1,0:T(1,128)}', space=vmem, size = 0x12000, scoped, tag = 'internal scratch']
  %s0 = inlined_call_operand.hbm [shape: f32[16,32], index: 0, kind: input, shape index: {}]
  %s1 = inlined_call_operand.vmem [shape: f32[1,32], index: 1, kind: input, shape index: {}]
  %s2 = inlined_call_operand.hbm [shape: f32[16,32], index: 2, kind: output, shape index: {}]
  %s3 = sld [smem:[#allocation0]]
  $region22: #{tpu_custom_call.1} parent=0
    _
  %s5 = ssub.s32 1, %s3
  %s6 = scalar_select 0, %s5, %s3
  $region1: #{tpu_custom_call.1} parent=0
    #allocation2 [shape = 'u8[8192]{0}', space=vmem, size = 0x2000, scoped, tag = 'input window, operand 0, single buffered']
    #allocation3 [shape = 's32[1]{0}', space=sflag, size = 0x4, scoped, tag = 'scoped memory for tpu_custom_call.1']
    #allocation4 [shape = 's32[1]{0}', space=sflag, size = 0x4, scoped, tag = 'scoped memory for tpu_custom_call.1']
    #allocation5 [shape = 'u8[8192]{0}', space=vmem, size = 0x2000, scoped, tag = 'output window, operand 0, single buffered']
    %7 = vsyncpa [#allocation3], 0
    %8 = vsyncpa [#allocation4], 0
    // Predicated region
    $region2: #{tpu_custom_call.1} parent=1 // pred_check
      _
    $region3: #{tpu_custom_call.1} parent=1 // pred_check_branch
      %10 = sbr.rel (0) target = $region5
    $region4: #{tpu_custom_call.1} parent=1 // pred_region
      %s12 = ssub.s32 256, 256
      %13 = vsyncadd [#allocation3], %s12
      %s14 = sshll.u32 [#allocation2], 4
      %s15 = int_to_ptr.vmem [resolvable:$true] %s14
      %20 = dma.hbm_to_vmem [thread:$0]  %s0, 256, %s15, [#allocation3], 128, 128, 8
    $region5: #{tpu_custom_call.1} parent=1 // pred_fallthru
      _
    // Predicated region
    $region6: #{tpu_custom_call.1} parent=1 // pred_check
      _
    $region7: #{tpu_custom_call.1} parent=1 // pred_check_branch
      %22 = sbr.rel (0) target = $region9
    $region8: #{tpu_custom_call.1} parent=1 // pred_region
      _
    $region9: #{tpu_custom_call.1} parent=1 // pred_fallthru
      _
    // Predicated region
    $region10: #{tpu_custom_call.1} parent=1 // pred_check
      _
    $region11: #{tpu_custom_call.1} parent=1 // pred_check_branch
      %24 = sbr.rel (0) target = $region13
    $region12: #{tpu_custom_call.1} parent=1 // pred_region
      %25 = dma.done [#allocation3], 256
    $region13: #{tpu_custom_call.1} parent=1 // pred_fallthru
      _
    %v26 = vld [vmem:[#allocation2] sm:$0xff]
    %v27 = vld [vmem:[#allocation2 + $0x8] sm:$0xff]
    %v28 = vmul.f32 %v26, %v26
    %v29 = vmul.f32 %v27, %v27
    %vm30 = vcmask 261120
    %v31 = vsel %vm30, %v28, 0.0
    %32 = vadd.xlane.f32.xlu0 %v31
    %v33 = vpop.xlane.xlu0 %32
    %v34 = vsel %vm30, %v29, 0.0
    %35 = vadd.xlane.f32.xlu0 %v34
    %v36 = vpop.xlane.xlu0 %35
    %v37 = vrcp.pop 32.0
    %v38 = vmul.f32 %v33, %v37
    %v39 = vmul.f32 %v36, %v37
    %v40 = vadd.f32 %v38, 1e-06
    %v41 = vadd.f32 %v39, 1e-06
    %v42 = vrsqrt.pop %v40
    %v43 = vrsqrt.pop %v41
    %v44 = vmul.f32 %v26, %v42
    %v45 = vmul.f32 %v27, %v43
    %v46 = vld [vmem:[%s1] sm:$0x1]
    %v48 = vlaneseq
    %v49 = vshrl.u32 %v48, 7
    %v50 = vsub.s32 0, %v49
    %v51 = vrot.slane %v46, %v50
    %v53 = vmul.f32 %v51, %v44
    %v54 = vmul.f32 %v51, %v45
    %55 = vst.msk [vmem:[#allocation5] sm:$0xff] %vm30, %v53
    %56 = vst.msk [vmem:[#allocation5 + $0x8] sm:$0xff] %vm30, %v54
    // Predicated region
    $region14: #{tpu_custom_call.1} parent=1 // pred_check
      _
    $region15: #{tpu_custom_call.1} parent=1 // pred_check_branch
      %58 = sbr.rel (0) target = $region17
    $region16: #{tpu_custom_call.1} parent=1 // pred_region
      %s60 = ssub.s32 256, 256
      %61 = vsyncadd [#allocation4], %s60
      %s62 = sshll.u32 [#allocation5], 4
      %s63 = int_to_ptr.vmem [resolvable:$true] %s62
      %68 = dma.vmem_to_hbm [thread:$0]  %s63, 256, %s2, [#allocation4], 128, 128, 8
    $region17: #{tpu_custom_call.1} parent=1 // pred_fallthru
      _
    // Predicated region
    $region18: #{tpu_custom_call.1} parent=1 // pred_check
      _
    $region19: #{tpu_custom_call.1} parent=1 // pred_check_branch
      %70 = sbr.rel (0) target = $region21
    $region20: #{tpu_custom_call.1} parent=1 // pred_region
      %71 = dma.done [#allocation4], 256
    $region21: #{tpu_custom_call.1} parent=1 // pred_fallthru
      _
    %72 = vsyncpa [#allocation3], 1
    %73 = vsyncpa [#allocation4], 1

</llo_original>
